<compile_context>
chip_gen: v7x
topology: tpu7x:2x2x1
jax: 0.10.0
libtpu: 0.0.40
codegen_flags: <defaults>
</compile_context>

<pallas_src>
import jax
import jax.numpy as jnp
from jax.experimental import pallas as pl
from jax.experimental.pallas import tpu as pltpu

_LANE = 128


def _simse_partial_kernel(pred_ref, real_ref, out_ref):
    """Accumulate per-P partial sums of (real - pred) into a (8,128) block."""
    t = pl.program_id(1)  # reduction axis

    @pl.when(t == 0)
    def _():
        out_ref[...] = jnp.zeros_like(out_ref)

    diff = real_ref[...].astype(jnp.float32) - pred_ref[...].astype(jnp.float32)
    tr = diff.shape[0]
    # (tr, 128) -> (tr//8, 8, 128) -> sum over leading axis: pure vreg adds
    # (VPU only), no cross-lane/sublane reduce on the hot path.
    out_ref[...] += diff.reshape(tr // 8, 8, _LANE).sum(axis=0)


def _simse_tail_kernel(pred_ref, real_ref, out_ref):
    """Single-block reduction of the leftover full 128-lane rows -> SMEM scalar."""
    diff = real_ref[...].astype(jnp.float32) - pred_ref[...].astype(jnp.float32)
    out_ref[0, 0] = jnp.sum(diff)


def _num_tensorcores() -> int:
    """2 TensorCores only on v7x; v5e/v6e (and unknown) -> 1."""
    try:
        kind = jax.devices()[0].device_kind.lower()
    except Exception:
        return 1
    return 2 if "v7" in kind else 1


def simse(pred, real, *, tile_rows=4096, max_parallel=None):
    assert pred.shape == real.shape, "pred/real shape mismatch"
    n = pred.size  # torch.numel(diffs)
    if n == 0:
        return jnp.float32(0.0)
    inv_n2 = 1.0 / (float(n) ** 2)

    # Flatten in native dtype (upcast happens in-vreg inside the kernel).
    flat_p = pred.reshape(-1)
    flat_r = real.reshape(-1)

    # Dtype-aware row alignment (sub-32-bit dtypes pack rows per sublane).
    itemsize = min(jnp.dtype(pred.dtype).itemsize, jnp.dtype(real.dtype).itemsize)
    packing = max(1, 4 // max(1, itemsize))
    row_mult = 8 * packing                    # 8 (f32) / 16 (bf16) / 32 (int8)

    m_full = n // _LANE                       # number of complete 128-lane rows
    tr = min(int(tile_rows), m_full)
    tr = (tr // row_mult) * row_mult          # dtype-aware block row rounding

    p_target = _num_tensorcores() if max_parallel is None else int(max_parallel)
    p_target = max(1, p_target)

    total = jnp.float32(0.0)
    rows_main = 0

    if tr >= row_mult:
        num_blocks = m_full // tr
        # Generation-aware P axis: keep both v7x TCs fed by rounding the block
        # count down to a multiple of p_target (leftover blocks go to the tail
        # kernel). On single-TC parts p_axis == 1 (plain serial reduction).
        if p_target > 1 and num_blocks >= p_target:
            p_axis = p_target
            blocks_used = (num_blocks // p_target) * p_target
        else:
            p_axis = 1
            blocks_used = num_blocks
        t_axis = blocks_used // p_axis

        rows_main = blocks_used * tr
        n_main = rows_main * _LANE

        slab_p = flat_p[:n_main].reshape(rows_main, _LANE)
        slab_r = flat_r[:n_main].reshape(rows_main, _LANE)

        bytes_accessed = n_main * (jnp.dtype(pred.dtype).itemsize
                                   + jnp.dtype(real.dtype).itemsize) \
            + p_axis * 8 * _LANE * 4

        partials = pl.pallas_call(
            _simse_partial_kernel,
            out_shape=jax.ShapeDtypeStruct((p_axis * 8, _LANE), jnp.float32),
            grid_spec=pltpu.PrefetchScalarGridSpec(
                num_scalar_prefetch=0,
                grid=(p_axis, t_axis),
                in_specs=[
                    pl.BlockSpec((tr, _LANE),
                                 lambda p, t, _ta=t_axis: (p * _ta + t, 0)),
                    pl.BlockSpec((tr, _LANE),
                                 lambda p, t, _ta=t_axis: (p * _ta + t, 0)),
                ],
                # Same block index across t => output block stays resident and
                # acts as the accumulator for that p-slice.
                out_specs=pl.BlockSpec((8, _LANE), lambda p, t: (p, 0)),
            ),
            compiler_params=pltpu.CompilerParams(
                dimension_semantics=("parallel", "arbitrary"),
            ),
            cost_estimate=pl.CostEstimate(
                flops=2 * n_main, transcendentals=0,
                bytes_accessed=bytes_accessed),
        )(slab_p, slab_r)
        total = total + jnp.sum(partials)

    # Leftover full 128-lane rows (< one p_axis*tile slab): tiny single-block
    # pallas_call with an SMEM scalar output (avoids an unfused HBM re-read).
    rem_rows = m_full - rows_main
    if rem_rows > 0:
        start = rows_main * _LANE
        stop = m_full * _LANE
        tail_p = flat_p[start:stop].reshape(rem_rows, _LANE)
        tail_r = flat_r[start:stop].reshape(rem_rows, _LANE)
        tail_sum = pl.pallas_call(
            _simse_tail_kernel,
            out_shape=jax.ShapeDtypeStruct((1, 1), jnp.float32),
            in_specs=[
                pl.BlockSpec((rem_rows, _LANE), lambda: (0, 0)),
                pl.BlockSpec((rem_rows, _LANE), lambda: (0, 0)),
            ],
            out_specs=pl.BlockSpec(memory_space=pltpu.MemorySpace.SMEM),
        )(tail_p, tail_r)
        total = total + tail_sum[0, 0]

    # Lane remainder (< 128 elements): plain jnp in the wrapper.
    n_rows_total = m_full * _LANE
    if n_rows_total < n:
        last_p = flat_p[n_rows_total:].astype(jnp.float32)
        last_r = flat_r[n_rows_total:].astype(jnp.float32)
        total = total + jnp.sum(last_r - last_p)

    return total * total * inv_n2


def _ref_simse(pred, real):
    diffs = (real.astype(jnp.float32) - pred.astype(jnp.float32))
    n = diffs.size
    return jnp.sum(diffs) ** 2 / n**2


if __name__ == "__main__":
    key = jax.random.PRNGKey(0)
    k1, k2, k3, k4 = jax.random.split(key, 4)

    # Small shape consistent with typical MISA usage (batch of feature maps).
    shape = (2, 4, 16, 16)
    pred = jax.random.normal(k1, shape, dtype=jnp.float32)
    real = jax.random.normal(k2, shape, dtype=jnp.float32)

    result = simse(pred, real)
    jax.block_until_ready(result)
    ref = _ref_simse(pred, real)
    assert jnp.allclose(result, ref, rtol=1e-4, atol=1e-6), (result, ref)

    # Exercise the multi-block + tail-kernel + lane-remainder paths with a
    # deliberately awkward shape and a tiny forced tile.
    shape2 = (3, 5, 37, 41)  # 22755 elements: 177 full rows + 99 tail elems
    pred2 = jax.random.normal(k3, shape2, dtype=jnp.float32)
    real2 = jax.random.normal(k4, shape2, dtype=jnp.float32)
    result2 = simse(pred2, real2, tile_rows=16, max_parallel=2)
    jax.block_until_ready(result2)
    ref2 = _ref_simse(pred2, real2)
    assert jnp.allclose(result2, ref2, rtol=1e-4, atol=1e-6), (result2, ref2)

    print("KERNEL_OK")
</pallas_src>

<mosaic_0001>
module attributes {stable_mosaic.version = 11 : i64} {
  func.func @_simse_partial_kernel(%arg0: i32, %arg1: i32, %arg2: memref<16x128xf32, #tpu.memory_space<vmem>>, %arg3: memref<16x128xf32, #tpu.memory_space<vmem>>, %arg4: memref<8x128xf32, #tpu.memory_space<vmem>>) attributes {dimension_semantics = [#tpu.dimension_semantics<parallel>, #tpu.dimension_semantics<arbitrary>], iteration_bounds = array<i64: 1, 1>, scalar_prefetch = 0 : i64, scratch_operands = 0 : i64, tpu.core_type = #tpu.core_type<tc>, window_params = [{transform_indices = @transform_0, window_bounds = array<i64: 16, 128>}, {transform_indices = @transform_1, window_bounds = array<i64: 16, 128>}, {transform_indices = @transform_2, window_bounds = array<i64: 8, 128>}]} {
    %c0_i32 = arith.constant 0 : i32
    %0 = arith.cmpi eq, %arg1, %c0_i32 : i32
    %1 = arith.extui %0 : i1 to i32
    %c0_i32_0 = arith.constant 0 : i32
    %2 = arith.cmpi ne, %1, %c0_i32_0 : i32
    scf.if %2 {
      %cst_8 = arith.constant 0.000000e+00 : f32
      %11 = vector.broadcast %cst_8 : f32 to vector<8x128xf32>
      %c0_9 = arith.constant 0 : index
      %c0_10 = arith.constant 0 : index
      %12 = vector.load %arg4[%c0_9, %c0_10] : memref<8x128xf32, #tpu.memory_space<vmem>>, vector<8x128xf32>
      tpu.vector_store %arg4[%c0_9, %c0_10], %11 {strides = array<i32>} : memref<8x128xf32, #tpu.memory_space<vmem>>, vector<8x128xf32>,
    } else {
    }
    %c0 = arith.constant 0 : index
    %c0_1 = arith.constant 0 : index
    %3 = vector.load %arg3[%c0, %c0_1] : memref<16x128xf32, #tpu.memory_space<vmem>>, vector<16x128xf32>
    %c0_2 = arith.constant 0 : index
    %c0_3 = arith.constant 0 : index
    %4 = vector.load %arg2[%c0_2, %c0_3] : memref<16x128xf32, #tpu.memory_space<vmem>>, vector<16x128xf32>
    %5 = arith.subf %3, %4 : vector<16x128xf32>
    %c0_4 = arith.constant 0 : index
    %c0_5 = arith.constant 0 : index
    %6 = vector.load %arg4[%c0_4, %c0_5] : memref<8x128xf32, #tpu.memory_space<vmem>>, vector<8x128xf32>
    %7 = vector.shape_cast %5 : vector<16x128xf32> to vector<2x8x128xf32>
    %cst = arith.constant dense<0.000000e+00> : vector<8x128xf32>
    %8 = vector.multi_reduction <add>, %7, %cst [0] : vector<2x8x128xf32> to vector<8x128xf32>
    %9 = arith.addf %6, %8 : vector<8x128xf32>
    %c0_6 = arith.constant 0 : index
    %c0_7 = arith.constant 0 : index
    %10 = vector.load %arg4[%c0_6, %c0_7] : memref<8x128xf32, #tpu.memory_space<vmem>>, vector<8x128xf32>
    tpu.vector_store %arg4[%c0_6, %c0_7], %9 {strides = array<i32>} : memref<8x128xf32, #tpu.memory_space<vmem>>, vector<8x128xf32>,
    return
  }
  func.func @transform_0(%arg0: i32, %arg1: i32) -> (i32, i32) {
    %c1_i32 = arith.constant 1 : i32
    %0 = arith.muli %arg0, %c1_i32 : i32
    %1 = arith.addi %0, %arg1 : i32
    %c0_i32 = arith.constant 0 : i32
    %c0_i32_0 = arith.constant 0 : i32
    return %1, %c0_i32 : i32, i32
  }
  func.func @transform_1(%arg0: i32, %arg1: i32) -> (i32, i32) {
    %c1_i32 = arith.constant 1 : i32
    %0 = arith.muli %arg0, %c1_i32 : i32
    %1 = arith.addi %0, %arg1 : i32
    %c0_i32 = arith.constant 0 : i32
    %c0_i32_0 = arith.constant 0 : i32
    return %1, %c0_i32 : i32, i32
  }
  func.func @transform_2(%arg0: i32, %arg1: i32) -> (i32, i32) {
    %c0_i32 = arith.constant 0 : i32
    %c0_i32_0 = arith.constant 0 : i32
    return %arg0, %c0_i32 : i32, i32
  }
}

</mosaic_0001>

<llo_original>
// kernel: tpu_custom_call.1
$region0: #{tpu_custom_call.1}
  #allocation0 [shape = 'u32[]', space=smem, size = 0x4, offset = 0x4, fixed_abs, tag = 'smem constant byte address 0x4 - core index']
  #allocation1 [shape = 'u32[144,128]{1,0:T(1,128)}', space=vmem, size = 0x12000, scoped, tag = 'internal scratch']
  %s0 = inlined_call_operand.hbm [shape: f32[16,128], index: 0, kind: input, shape index: {}]
  %s1 = inlined_call_operand.hbm [shape: f32[16,128], index: 1, kind: input, shape index: {}]
  %s2 = inlined_call_operand.hbm [shape: f32[8,128], index: 2, kind: output, shape index: {}]
  %s3 = sld [smem:[#allocation0]]
  $region30: #{tpu_custom_call.1} parent=0
    _
  %s5 = ssub.s32 1, %s3
  %s6 = scalar_select 0, %s5, %s3
  $region1: #{tpu_custom_call.1} parent=0
    #allocation2 [shape = 'u8[8192]{0}', space=vmem, size = 0x2000, scoped, tag = 'input window, operand 0, single buffered']
    #allocation3 [shape = 's32[1]{0}', space=sflag, size = 0x4, scoped, tag = 'scoped memory for tpu_custom_call.1']
    #allocation4 [shape = 's32[1]{0}', space=sflag, size = 0x4, scoped, tag = 'scoped memory for tpu_custom_call.1']
    #allocation5 [shape = 'u8[8192]{0}', space=vmem, size = 0x2000, scoped, tag = 'input window, operand 1, single buffered']
    #allocation6 [shape = 's32[1]{0}', space=sflag, size = 0x4, scoped, tag = 'scoped memory for tpu_custom_call.1']
    #allocation7 [shape = 'u8[4096]{0}', space=vmem, size = 0x1000, scoped, tag = 'output window, operand 0, single buffered']
    %7 = vsyncpa [#allocation3], 0
    %8 = vsyncpa [#allocation6], 0
    %9 = vsyncpa [#allocation4], 0
    // Predicated region
    $region2: #{tpu_custom_call.1} parent=1 // pred_check
      _
    $region3: #{tpu_custom_call.1} parent=1 // pred_check_branch
      %11 = sbr.rel (0) target = $region5
    $region4: #{tpu_custom_call.1} parent=1 // pred_region
      %s12 = sadd.s32 0, 0
      %s13 = smul.u32 2, %s12
      %s15 = ssub.s32 256, 256
      %16 = vsyncadd [#allocation3], %s15
      %s17 = smul.addr %s13, 128
      %s18 = scalar_lea.hbm %s0, %s17
      %s19 = sshll.u32 [#allocation2], 4
      %s20 = int_to_ptr.vmem [resolvable:$true] %s19
      %25 = dma.hbm_to_vmem [thread:$0]  %s18, 256, %s20, [#allocation3], 128, 128, 8
    $region5: #{tpu_custom_call.1} parent=1 // pred_fallthru
      _
    // Predicated region
    $region6: #{tpu_custom_call.1} parent=1 // pred_check
      _
    $region7: #{tpu_custom_call.1} parent=1 // pred_check_branch
      %27 = sbr.rel (0) target = $region9
    $region8: #{tpu_custom_call.1} parent=1 // pred_region
      %s28 = sadd.s32 0, 0
      %s29 = smul.u32 2, %s28
      %s31 = ssub.s32 256, 256
      %32 = vsyncadd [#allocation6], %s31
      %s33 = smul.addr %s29, 128
      %s34 = scalar_lea.hbm %s1, %s33
      %s35 = sshll.u32 [#allocation5], 4
      %s36 = int_to_ptr.vmem [resolvable:$true] %s35
      %41 = dma.hbm_to_vmem [thread:$0]  %s34, 256, %s36, [#allocation6], 128, 128, 8
    $region9: #{tpu_custom_call.1} parent=1 // pred_fallthru
      _
    // Predicated region
    $region10: #{tpu_custom_call.1} parent=1 // pred_check
      _
    $region11: #{tpu_custom_call.1} parent=1 // pred_check_branch
      %43 = sbr.rel (0) target = $region13
    $region12: #{tpu_custom_call.1} parent=1 // pred_region
      %44 = dma.done [#allocation3], 256
    $region13: #{tpu_custom_call.1} parent=1 // pred_fallthru
      _
    // Predicated region
    $region14: #{tpu_custom_call.1} parent=1 // pred_check
      _
    $region15: #{tpu_custom_call.1} parent=1 // pred_check_branch
      %46 = sbr.rel (0) target = $region17
    $region16: #{tpu_custom_call.1} parent=1 // pred_region
      %47 = dma.done [#allocation6], 256
    $region17: #{tpu_custom_call.1} parent=1 // pred_fallthru
      _
    %s48 = sadd.s32 0, 0
    %s49 = smul.u32 2, %s48
    %s50 = sadd.s32 0, 0
    %s51 = smul.u32 2, %s50
    %p52 = scmp.eq.s32.totalorder 0, 0
    // Predicated region
    $region18: #{tpu_custom_call.1} parent=1 // pred_check
      %p53 = pneg %p52
    $region19: #{tpu_custom_call.1} parent=1 // pred_check_branch
      %55 = sbr.rel (%p53) target = $region21
    $region20: #{tpu_custom_call.1} parent=1 // pred_region
      %56 = vst [vmem:[#allocation7] sm:$0xff] 0.0
    $region21: #{tpu_custom_call.1} parent=1 // pred_fallthru
      _
    %v57 = vld [vmem:[#allocation5] sm:$0xff]
    %v58 = vld [vmem:[#allocation5 + $0x8] sm:$0xff]
    %v59 = vld [vmem:[#allocation2] sm:$0xff]
    %v60 = vld [vmem:[#allocation2 + $0x8] sm:$0xff]
    %v61 = vsub.f32 %v57, %v59
    %v62 = vsub.f32 %v58, %v60
    %v63 = vld [vmem:[#allocation7] sm:$0xff]
    %v64 = vadd.f32 %v61, %v62
    %v65 = vadd.f32 %v63, %v64
    %66 = vst [vmem:[#allocation7] sm:$0xff] %v65
    // Predicated region
    $region22: #{tpu_custom_call.1} parent=1 // pred_check
      _
    $region23: #{tpu_custom_call.1} parent=1 // pred_check_branch
      %68 = sbr.rel (0) target = $region25
    $region24: #{tpu_custom_call.1} parent=1 // pred_region
      %s70 = ssub.s32 128, 128
      %71 = vsyncadd [#allocation4], %s70
      %s73 = sshll.u32 [#allocation7], 4
      %s74 = int_to_ptr.vmem [resolvable:$true] %s73
      %76 = dma.vmem_to_hbm [thread:$0]  %s74, 128, %s2, [#allocation4]
    $region25: #{tpu_custom_call.1} parent=1 // pred_fallthru
      _
    // Predicated region
    $region26: #{tpu_custom_call.1} parent=1 // pred_check
      _
    $region27: #{tpu_custom_call.1} parent=1 // pred_check_branch
      %78 = sbr.rel (0) target = $region29
    $region28: #{tpu_custom_call.1} parent=1 // pred_region
      %79 = dma.done [#allocation4], 128
    $region29: #{tpu_custom_call.1} parent=1 // pred_fallthru
      _
    %80 = vsyncpa [#allocation3], 1
    %81 = vsyncpa [#allocation6], 1
    %82 = vsyncpa [#allocation4], 1

</llo_original>
